<compile_context>
chip_gen: v6e
topology: v6e:2x2x1
jax: 0.10.0
libtpu: 0.0.40
codegen_flags: <defaults>
</compile_context>

<pallas_src>
from functools import partial

import jax
import jax.numpy as jnp
from jax.experimental import pallas as pl
from jax.experimental.pallas import tpu as pltpu


# --------------------------------------------------------------------------- #
# Pallas kernel: per-mode complex channel contraction
# --------------------------------------------------------------------------- #
def _contract_kernel(x_ref, w_ref, o_ref):
    """out[b,o,k] = sum_i x[b,i,k] * w[i,o,k]   (complex MAC over channels)

    x_ref : (2, 1, Cin, TK)    f32 real/imag planes of the truncated spectrum
    w_ref : (2, Cin, TCo, TK)  bf16 (or f32) real/imag planes of the weight tile
    o_ref : (2, 1, TCo, TK)    f32 output real/imag planes
    """
    cin = w_ref.shape[1]
    acc_shape = o_ref.shape[2:]                    # (TCo, TK)

    def mac(i, acc):
        acc_re, acc_im = acc
        # (1, TK) row of x, broadcast over the TCo weight rows in the VALU.
        # TODO(synk): a stride-0 sublane-broadcast load (pl.ds(i, TCo, stride=0))
        # would move this broadcast onto the spare vld slot; kept on the safe
        # arithmetic-broadcast path here.
        xre = x_ref[0, 0, pl.ds(i, 1), :].astype(jnp.float32)
        xim = x_ref[1, 0, pl.ds(i, 1), :].astype(jnp.float32)
        wre = w_ref[0, i].astype(jnp.float32)      # (TCo, TK) upcast (v5e-safe)
        wim = w_ref[1, i].astype(jnp.float32)
        acc_re = acc_re + (xre * wre - xim * wim)
        acc_im = acc_im + (xre * wim + xim * wre)
        return acc_re, acc_im

    acc = (jnp.zeros(acc_shape, jnp.float32), jnp.zeros(acc_shape, jnp.float32))
    if cin <= 16:
        # small Cin: fully static unroll
        for i in range(cin):
            acc = mac(i, acc)
    else:
        # large Cin (realistic SFNO C~256): partial unroll keeps code size,
        # compile time and live ranges bounded while keeping LLO visibility.
        acc = jax.lax.fori_loop(0, cin, mac, acc, unroll=8)

    o_ref[0, 0] = acc[0].astype(o_ref.dtype)
    o_ref[1, 0] = acc[1].astype(o_ref.dtype)


# --------------------------------------------------------------------------- #
# Tiling / budget helpers
# --------------------------------------------------------------------------- #
def _vmem_budget_bytes():
    """Generation-aware working-set budget: ~5/8 of per-core VMEM, capped at
    80 MiB (v7x 64 MiB/TC -> ~40 MiB; v5e/v6e 128 MiB -> 80 MiB)."""
    try:
        cap = int(pltpu.get_tpu_info().vmem_capacity_bytes)
    except Exception:
        cap = 64 * 2**20                           # conservative fallback
    return min((cap * 5) // 8, 80 * 2**20)


def _padded_modes(k):
    """Pad the flattened mode count to a lane-dense multiple of 128, preferring
    larger power-of-two granularity (bigger TK tiles) while keeping the padding
    waste under ~12.5%."""
    for g in (1024, 512, 256, 128):
        kp = g * pl.cdiv(k, g)
        if kp - k <= max(k // 8, 127):
            return kp
    return 128 * pl.cdiv(k, 128)


def _choose_tiles(cin, cout_p, kp, *, x_itemsize, w_itemsize, budget):
    """Pick (TCo, TK): lane-dense, spill-free (TCo*TK <= 8192 so the two f32
    accumulators + two upcast weight planes fit the 64-vreg file), and with a
    double-buffered working set under the generation-aware VMEM budget."""
    tk = max(t for t in (128, 256, 512, 1024) if kp % t == 0)
    tco = 16 if cout_p % 16 == 0 else 8            # cout_p is a multiple of 8

    def working_set(tco_, tk_):
        x_blk = 2 * cin * tk_ * x_itemsize         # (2, 1, Cin, TK)
        w_blk = 2 * cin * tco_ * tk_ * w_itemsize  # (2, Cin, TCo, TK)
        o_blk = 2 * tco_ * tk_ * 4                 # (2, 1, TCo, TK) f32
        return 2 * (x_blk + w_blk + o_blk)         # pipeline double-buffers

    while (tco * tk > 8192 or working_set(tco, tk) > budget) and tk > 128:
        tk //= 2
    while (tco * tk > 8192 or working_set(tco, tk) > budget) and tco > 8:
        tco //= 2
    return tco, tk


# --------------------------------------------------------------------------- #
# pallas_call wrapper
# --------------------------------------------------------------------------- #
def spectral_contract(x_ri, w_ri):
    """Tiled spectral contraction.

    x_ri : (2, B, Cin, Kp)      f32 packed real/imag truncated spectrum
    w_ri : (2, Cin, Cout_p, Kp) bf16/f32 packed real/imag ComplexDense weight
    returns (2, B, Cout_p, Kp)  f32
    """
    _, B, Cin, Kp = x_ri.shape
    cout_p = w_ri.shape[2]
    budget = _vmem_budget_bytes()
    TCo, TK = _choose_tiles(Cin, cout_p, Kp,
                            x_itemsize=x_ri.dtype.itemsize,
                            w_itemsize=w_ri.dtype.itemsize,
                            budget=budget)

    # Batch innermost: the weight block index (0, 0, co, kk) is constant across
    # consecutive b steps, so the weight is DMA'd from HBM exactly once.
    grid = (cout_p // TCo, Kp // TK, B)

    return pl.pallas_call(
        _contract_kernel,
        grid=grid,
        in_specs=[
            pl.BlockSpec((2, 1, Cin, TK), lambda co, kk, b: (0, b, 0, kk)),
            pl.BlockSpec((2, Cin, TCo, TK), lambda co, kk, b: (0, 0, co, kk)),
        ],
        out_specs=pl.BlockSpec((2, 1, TCo, TK), lambda co, kk, b: (0, b, co, kk)),
        out_shape=jax.ShapeDtypeStruct((2, B, cout_p, Kp), jnp.float32),
        compiler_params=pltpu.CompilerParams(
            dimension_semantics=("parallel", "parallel", "arbitrary"),
            vmem_limit_bytes=int(budget)),
    )(x_ri, w_ri)


# --------------------------------------------------------------------------- #
# Parameter-setup-time weight packing (done once, NOT per forward call)
# --------------------------------------------------------------------------- #
def pack_spectral_weight(w_re, w_im, weight_dtype=jnp.bfloat16):
    """Pack the ComplexDense weight once at parameter-setup time.

    w_re, w_im : (Cin, Cout, modes_lat, modes_lon) real/imag planes
    returns (2, Cin, Cout_p, Kp) with Cout zero-padded to a multiple of 8 and
    the flattened mode axis zero-padded lane-dense (multiple of 128).
    """
    cin, cout, mlat, mlon = w_re.shape
    K = mlat * mlon
    Kp = _padded_modes(K)
    cout_p = 8 * pl.cdiv(cout, 8)
    w_ri = jnp.stack([w_re, w_im]).reshape(2, cin, cout, K)
    w_ri = jnp.pad(w_ri, ((0, 0), (0, 0), (0, cout_p - cout), (0, Kp - K)))
    return w_ri.astype(weight_dtype)


# --------------------------------------------------------------------------- #
# Forward pass (RealFFT2 / InverseRealFFT2 configuration of SpectralConvS2)
# --------------------------------------------------------------------------- #
def spectral_conv_s2_forward(x, w_ri, *, out_channels, modes_lat, modes_lon):
    """x : (B, Cin, H, W) real NCHW; w_ri : packed weight from
    pack_spectral_weight.  Returns (y, residual) like the PyTorch module."""
    dtype = x.dtype
    residual = x                                   # scale_residual == False
    xf = x.astype(jnp.float32)                     # x = x.float()
    B, Cin, H, W = xf.shape
    K = modes_lat * modes_lon
    cout_p, Kp = w_ri.shape[2], w_ri.shape[3]

    # forward transform (RealFFT2 wrapper semantics)
    xh = jnp.fft.rfft2(xf, norm="ortho")           # (B, Cin, H, W//2+1) complex64
    L, M = xh.shape[-2], xh.shape[-1]

    # truncate to retained modes, pack re/im planes, pad mode axis lane-dense.
    # TODO(synk): the [:modes_lat] slice matches torch-harmonics RealFFT2 only
    # for modes_lat == H (the configuration exercised here); for modes_lat < H
    # the module keeps a symmetric +/- latitude frequency set.
    xt = xh[..., :modes_lat, :modes_lon]
    x_ri = jnp.stack([jnp.real(xt), jnp.imag(xt)]).reshape(2, B, Cin, K)
    if Kp != K:
        x_ri = jnp.pad(x_ri, ((0, 0), (0, 0), (0, 0), (0, Kp - K)))

    # hot path: per-mode complex channel contraction (Pallas kernel)
    o_ri = spectral_contract(x_ri, w_ri)           # (2, B, Cout_p, Kp) f32
    o_ri = o_ri[:, :, :out_channels, :K].reshape(
        2, B, out_channels, modes_lat, modes_lon)
    yh = jax.lax.complex(o_ri[0], o_ri[1])

    # xp[..., :modes_lat, :modes_lon] = contract(...)  -- via zero-padding
    xp = jnp.pad(yh, ((0, 0), (0, 0), (0, L - modes_lat), (0, M - modes_lon)))

    # inverse transform (InverseRealFFT2 wrapper semantics); bias == False
    y = jnp.fft.irfft2(xp, s=(H, W), norm="ortho")
    return y.astype(dtype), residual               # x = x.type(dtype)


# --------------------------------------------------------------------------- #
if __name__ == "__main__":
    key = jax.random.PRNGKey(0)
    B, Cin, Cout, H, W = 2, 4, 4, 16, 16
    mlat, mlon = H, W // 2 + 1                     # lmax, mmax of inverse transform
    scale = 2.0 / (Cin + Cout)                     # scale == 'auto'

    kx, kw = jax.random.split(key)
    x = jax.random.normal(kx, (B, Cin, H, W), dtype=jnp.float32)
    # ComplexDense weight: shape [Cin, Cout, modes_lat, modes_lon, 2], ~N(0, scale)
    w = scale * jax.random.normal(kw, (Cin, Cout, mlat, mlon, 2), dtype=jnp.float32)
    w_re, w_im = w[..., 0], w[..., 1]

    # parameter-setup-time packing (once, outside the forward pass)
    w_ri = pack_spectral_weight(w_re, w_im, weight_dtype=jnp.bfloat16)

    fwd = jax.jit(partial(spectral_conv_s2_forward,
                          out_channels=Cout, modes_lat=mlat, modes_lon=mlon))
    y, residual = fwd(x, w_ri)
    jax.block_until_ready((y, residual))

    # reference check (pure JAX) against the same bf16-stored weight
    K = mlat * mlon
    w_used = w_ri.astype(jnp.float32)[:, :, :Cout, :K].reshape(
        2, Cin, Cout, mlat, mlon)
    wc = jax.lax.complex(w_used[0], w_used[1])
    xh_ref = jnp.fft.rfft2(x, norm="ortho")[..., :mlat, :mlon]
    yh_ref = jnp.einsum("bixy,ioxy->boxy", xh_ref, wc,
                        precision=jax.lax.Precision.HIGHEST)
    xp_ref = jnp.zeros((B, Cout, H, W // 2 + 1), jnp.complex64)
    xp_ref = xp_ref.at[..., :mlat, :mlon].set(yh_ref)
    y_ref = jnp.fft.irfft2(xp_ref, s=(H, W), norm="ortho")

    assert y.shape == (B, Cout, H, W)
    assert residual.shape == (B, Cin, H, W)
    assert jnp.allclose(y, y_ref, atol=2e-4, rtol=2e-4)
    assert jnp.array_equal(residual, x)
    print("KERNEL_OK")
</pallas_src>

<mosaic_0001>
module attributes {stable_mosaic.version = 11 : i64} {
  func.func @_contract_kernel(%arg0: i32, %arg1: i32, %arg2: i32, %arg3: memref<2x1x4x256xf32, #tpu.memory_space<vmem>>, %arg4: memref<2x4x8x256xbf16, #tpu.memory_space<vmem>>, %arg5: memref<2x1x8x256xf32, #tpu.memory_space<vmem>>) attributes {dimension_semantics = [#tpu.dimension_semantics<parallel>, #tpu.dimension_semantics<parallel>, #tpu.dimension_semantics<arbitrary>], iteration_bounds = array<i64: 1, 1, 2>, scalar_prefetch = 0 : i64, scratch_operands = 0 : i64, tpu.core_type = #tpu.core_type<tc>, window_params = [{transform_indices = @transform_0, window_bounds = array<i64: 2, 1, 4, 256>}, {transform_indices = @transform_1, window_bounds = array<i64: 2, 4, 8, 256>}, {transform_indices = @transform_2, window_bounds = array<i64: 2, 1, 8, 256>}]} {
    %cst = arith.constant 0.000000e+00 : f32
    %0 = vector.broadcast %cst : f32 to vector<8x256xf32>
    %cst_0 = arith.constant 0.000000e+00 : f32
    %1 = vector.broadcast %cst_0 : f32 to vector<8x256xf32>
    %c0 = arith.constant 0 : index
    %c0_1 = arith.constant 0 : index
    %c0_2 = arith.constant 0 : index
    %c0_3 = arith.constant 0 : index
    %2 = vector.load %arg3[%c0, %c0_1, %c0_2, %c0_3] : memref<2x1x4x256xf32, #tpu.memory_space<vmem>>, vector<1x1x1x256xf32>
    %3 = vector.shape_cast %2 : vector<1x1x1x256xf32> to vector<1x256xf32>
    %c1 = arith.constant 1 : index
    %c0_4 = arith.constant 0 : index
    %c0_5 = arith.constant 0 : index
    %c0_6 = arith.constant 0 : index
    %4 = vector.load %arg3[%c1, %c0_4, %c0_5, %c0_6] : memref<2x1x4x256xf32, #tpu.memory_space<vmem>>, vector<1x1x1x256xf32>
    %5 = vector.shape_cast %4 : vector<1x1x1x256xf32> to vector<1x256xf32>
    %c0_7 = arith.constant 0 : index
    %c0_8 = arith.constant 0 : index
    %c0_9 = arith.constant 0 : index
    %c0_10 = arith.constant 0 : index
    %6 = vector.load %arg4[%c0_7, %c0_8, %c0_9, %c0_10] : memref<2x4x8x256xbf16, #tpu.memory_space<vmem>>, vector<1x1x8x256xbf16>
    %7 = vector.shape_cast %6 : vector<1x1x8x256xbf16> to vector<8x256xbf16>
    %8 = arith.extf %7 : vector<8x256xbf16> to vector<8x256xf32>
    %c1_11 = arith.constant 1 : index
    %c0_12 = arith.constant 0 : index
    %c0_13 = arith.constant 0 : index
    %c0_14 = arith.constant 0 : index
    %9 = vector.load %arg4[%c1_11, %c0_12, %c0_13, %c0_14] : memref<2x4x8x256xbf16, #tpu.memory_space<vmem>>, vector<1x1x8x256xbf16>
    %10 = vector.shape_cast %9 : vector<1x1x8x256xbf16> to vector<8x256xbf16>
    %11 = arith.extf %10 : vector<8x256xbf16> to vector<8x256xf32>
    %12 = vector.broadcast %3 : vector<1x256xf32> to vector<8x256xf32>
    %13 = arith.mulf %12, %8 : vector<8x256xf32>
    %14 = vector.broadcast %5 : vector<1x256xf32> to vector<8x256xf32>
    %15 = arith.mulf %14, %11 : vector<8x256xf32>
    %16 = arith.subf %13, %15 : vector<8x256xf32>
    %17 = arith.addf %0, %16 : vector<8x256xf32>
    %18 = vector.broadcast %3 : vector<1x256xf32> to vector<8x256xf32>
    %19 = arith.mulf %18, %11 : vector<8x256xf32>
    %20 = vector.broadcast %5 : vector<1x256xf32> to vector<8x256xf32>
    %21 = arith.mulf %20, %8 : vector<8x256xf32>
    %22 = arith.addf %19, %21 : vector<8x256xf32>
    %23 = arith.addf %1, %22 : vector<8x256xf32>
    %c0_15 = arith.constant 0 : index
    %c0_16 = arith.constant 0 : index
    %c1_17 = arith.constant 1 : index
    %c0_18 = arith.constant 0 : index
    %24 = vector.load %arg3[%c0_15, %c0_16, %c1_17, %c0_18] : memref<2x1x4x256xf32, #tpu.memory_space<vmem>>, vector<1x1x1x256xf32>
    %25 = vector.shape_cast %24 : vector<1x1x1x256xf32> to vector<1x256xf32>
    %c1_19 = arith.constant 1 : index
    %c0_20 = arith.constant 0 : index
    %c1_21 = arith.constant 1 : index
    %c0_22 = arith.constant 0 : index
    %26 = vector.load %arg3[%c1_19, %c0_20, %c1_21, %c0_22] : memref<2x1x4x256xf32, #tpu.memory_space<vmem>>, vector<1x1x1x256xf32>
    %27 = vector.shape_cast %26 : vector<1x1x1x256xf32> to vector<1x256xf32>
    %c0_23 = arith.constant 0 : index
    %c1_24 = arith.constant 1 : index
    %c0_25 = arith.constant 0 : index
    %c0_26 = arith.constant 0 : index
    %28 = vector.load %arg4[%c0_23, %c1_24, %c0_25, %c0_26] : memref<2x4x8x256xbf16, #tpu.memory_space<vmem>>, vector<1x1x8x256xbf16>
    %29 = vector.shape_cast %28 : vector<1x1x8x256xbf16> to vector<8x256xbf16>
    %30 = arith.extf %29 : vector<8x256xbf16> to vector<8x256xf32>
    %c1_27 = arith.constant 1 : index
    %c1_28 = arith.constant 1 : index
    %c0_29 = arith.constant 0 : index
    %c0_30 = arith.constant 0 : index
    %31 = vector.load %arg4[%c1_27, %c1_28, %c0_29, %c0_30] : memref<2x4x8x256xbf16, #tpu.memory_space<vmem>>, vector<1x1x8x256xbf16>
    %32 = vector.shape_cast %31 : vector<1x1x8x256xbf16> to vector<8x256xbf16>
    %33 = arith.extf %32 : vector<8x256xbf16> to vector<8x256xf32>
    %34 = vector.broadcast %25 : vector<1x256xf32> to vector<8x256xf32>
    %35 = arith.mulf %34, %30 : vector<8x256xf32>
    %36 = vector.broadcast %27 : vector<1x256xf32> to vector<8x256xf32>
    %37 = arith.mulf %36, %33 : vector<8x256xf32>
    %38 = arith.subf %35, %37 : vector<8x256xf32>
    %39 = arith.addf %17, %38 : vector<8x256xf32>
    %40 = vector.broadcast %25 : vector<1x256xf32> to vector<8x256xf32>
    %41 = arith.mulf %40, %33 : vector<8x256xf32>
    %42 = vector.broadcast %27 : vector<1x256xf32> to vector<8x256xf32>
    %43 = arith.mulf %42, %30 : vector<8x256xf32>
    %44 = arith.addf %41, %43 : vector<8x256xf32>
    %45 = arith.addf %23, %44 : vector<8x256xf32>
    %c0_31 = arith.constant 0 : index
    %c0_32 = arith.constant 0 : index
    %c2 = arith.constant 2 : index
    %c0_33 = arith.constant 0 : index
    %46 = vector.load %arg3[%c0_31, %c0_32, %c2, %c0_33] : memref<2x1x4x256xf32, #tpu.memory_space<vmem>>, vector<1x1x1x256xf32>
    %47 = vector.shape_cast %46 : vector<1x1x1x256xf32> to vector<1x256xf32>
    %c1_34 = arith.constant 1 : index
    %c0_35 = arith.constant 0 : index
    %c2_36 = arith.constant 2 : index
    %c0_37 = arith.constant 0 : index
    %48 = vector.load %arg3[%c1_34, %c0_35, %c2_36, %c0_37] : memref<2x1x4x256xf32, #tpu.memory_space<vmem>>, vector<1x1x1x256xf32>
    %49 = vector.shape_cast %48 : vector<1x1x1x256xf32> to vector<1x256xf32>
    %c0_38 = arith.constant 0 : index
    %c2_39 = arith.constant 2 : index
    %c0_40 = arith.constant 0 : index
    %c0_41 = arith.constant 0 : index
    %50 = vector.load %arg4[%c0_38, %c2_39, %c0_40, %c0_41] : memref<2x4x8x256xbf16, #tpu.memory_space<vmem>>, vector<1x1x8x256xbf16>
    %51 = vector.shape_cast %50 : vector<1x1x8x256xbf16> to vector<8x256xbf16>
    %52 = arith.extf %51 : vector<8x256xbf16> to vector<8x256xf32>
    %c1_42 = arith.constant 1 : index
    %c2_43 = arith.constant 2 : index
    %c0_44 = arith.constant 0 : index
    %c0_45 = arith.constant 0 : index
    %53 = vector.load %arg4[%c1_42, %c2_43, %c0_44, %c0_45] : memref<2x4x8x256xbf16, #tpu.memory_space<vmem>>, vector<1x1x8x256xbf16>
    %54 = vector.shape_cast %53 : vector<1x1x8x256xbf16> to vector<8x256xbf16>
    %55 = arith.extf %54 : vector<8x256xbf16> to vector<8x256xf32>
    %56 = vector.broadcast %47 : vector<1x256xf32> to vector<8x256xf32>
    %57 = arith.mulf %56, %52 : vector<8x256xf32>
    %58 = vector.broadcast %49 : vector<1x256xf32> to vector<8x256xf32>
    %59 = arith.mulf %58, %55 : vector<8x256xf32>
    %60 = arith.subf %57, %59 : vector<8x256xf32>
    %61 = arith.addf %39, %60 : vector<8x256xf32>
    %62 = vector.broadcast %47 : vector<1x256xf32> to vector<8x256xf32>
    %63 = arith.mulf %62, %55 : vector<8x256xf32>
    %64 = vector.broadcast %49 : vector<1x256xf32> to vector<8x256xf32>
    %65 = arith.mulf %64, %52 : vector<8x256xf32>
    %66 = arith.addf %63, %65 : vector<8x256xf32>
    %67 = arith.addf %45, %66 : vector<8x256xf32>
    %c0_46 = arith.constant 0 : index
    %c0_47 = arith.constant 0 : index
    %c3 = arith.constant 3 : index
    %c0_48 = arith.constant 0 : index
    %68 = vector.load %arg3[%c0_46, %c0_47, %c3, %c0_48] : memref<2x1x4x256xf32, #tpu.memory_space<vmem>>, vector<1x1x1x256xf32>
    %69 = vector.shape_cast %68 : vector<1x1x1x256xf32> to vector<1x256xf32>
    %c1_49 = arith.constant 1 : index
    %c0_50 = arith.constant 0 : index
    %c3_51 = arith.constant 3 : index
    %c0_52 = arith.constant 0 : index
    %70 = vector.load %arg3[%c1_49, %c0_50, %c3_51, %c0_52] : memref<2x1x4x256xf32, #tpu.memory_space<vmem>>, vector<1x1x1x256xf32>
    %71 = vector.shape_cast %70 : vector<1x1x1x256xf32> to vector<1x256xf32>
    %c0_53 = arith.constant 0 : index
    %c3_54 = arith.constant 3 : index
    %c0_55 = arith.constant 0 : index
    %c0_56 = arith.constant 0 : index
    %72 = vector.load %arg4[%c0_53, %c3_54, %c0_55, %c0_56] : memref<2x4x8x256xbf16, #tpu.memory_space<vmem>>, vector<1x1x8x256xbf16>
    %73 = vector.shape_cast %72 : vector<1x1x8x256xbf16> to vector<8x256xbf16>
    %74 = arith.extf %73 : vector<8x256xbf16> to vector<8x256xf32>
    %c1_57 = arith.constant 1 : index
    %c3_58 = arith.constant 3 : index
    %c0_59 = arith.constant 0 : index
    %c0_60 = arith.constant 0 : index
    %75 = vector.load %arg4[%c1_57, %c3_58, %c0_59, %c0_60] : memref<2x4x8x256xbf16, #tpu.memory_space<vmem>>, vector<1x1x8x256xbf16>
    %76 = vector.shape_cast %75 : vector<1x1x8x256xbf16> to vector<8x256xbf16>
    %77 = arith.extf %76 : vector<8x256xbf16> to vector<8x256xf32>
    %78 = vector.broadcast %69 : vector<1x256xf32> to vector<8x256xf32>
    %79 = arith.mulf %78, %74 : vector<8x256xf32>
    %80 = vector.broadcast %71 : vector<1x256xf32> to vector<8x256xf32>
    %81 = arith.mulf %80, %77 : vector<8x256xf32>
    %82 = arith.subf %79, %81 : vector<8x256xf32>
    %83 = arith.addf %61, %82 : vector<8x256xf32>
    %84 = vector.broadcast %69 : vector<1x256xf32> to vector<8x256xf32>
    %85 = arith.mulf %84, %77 : vector<8x256xf32>
    %86 = vector.broadcast %71 : vector<1x256xf32> to vector<8x256xf32>
    %87 = arith.mulf %86, %74 : vector<8x256xf32>
    %88 = arith.addf %85, %87 : vector<8x256xf32>
    %89 = arith.addf %67, %88 : vector<8x256xf32>
    %c0_61 = arith.constant 0 : index
    %c0_62 = arith.constant 0 : index
    %c0_63 = arith.constant 0 : index
    %c0_64 = arith.constant 0 : index
    %90 = vector.load %arg5[%c0_61, %c0_62, %c0_63, %c0_64] : memref<2x1x8x256xf32, #tpu.memory_space<vmem>>, vector<1x1x8x256xf32>
    %91 = vector.shape_cast %90 : vector<1x1x8x256xf32> to vector<8x256xf32>
    %92 = vector.shape_cast %83 : vector<8x256xf32> to vector<1x1x8x256xf32>
    tpu.vector_store %arg5[%c0_61, %c0_62, %c0_63, %c0_64], %92 {strides = array<i32>} : memref<2x1x8x256xf32, #tpu.memory_space<vmem>>, vector<1x1x8x256xf32>,
    %c1_65 = arith.constant 1 : index
    %c0_66 = arith.constant 0 : index
    %c0_67 = arith.constant 0 : index
    %c0_68 = arith.constant 0 : index
    %93 = vector.load %arg5[%c1_65, %c0_66, %c0_67, %c0_68] : memref<2x1x8x256xf32, #tpu.memory_space<vmem>>, vector<1x1x8x256xf32>
    %94 = vector.shape_cast %93 : vector<1x1x8x256xf32> to vector<8x256xf32>
    %95 = vector.shape_cast %89 : vector<8x256xf32> to vector<1x1x8x256xf32>
    tpu.vector_store %arg5[%c1_65, %c0_66, %c0_67, %c0_68], %95 {strides = array<i32>} : memref<2x1x8x256xf32, #tpu.memory_space<vmem>>, vector<1x1x8x256xf32>,
    return
  }
  func.func @transform_0(%arg0: i32, %arg1: i32, %arg2: i32) -> (i32, i32, i32, i32) {
    %c0_i32 = arith.constant 0 : i32
    %c0_i32_0 = arith.constant 0 : i32
    %c0_i32_1 = arith.constant 0 : i32
    return %c0_i32, %arg2, %c0_i32_0, %arg1 : i32, i32, i32, i32
  }
  func.func @transform_1(%arg0: i32, %arg1: i32, %arg2: i32) -> (i32, i32, i32, i32) {
    %c0_i32 = arith.constant 0 : i32
    %c0_i32_0 = arith.constant 0 : i32
    %c0_i32_1 = arith.constant 0 : i32
    return %c0_i32, %c0_i32_0, %arg0, %arg1 : i32, i32, i32, i32
  }
  func.func @transform_2(%arg0: i32, %arg1: i32, %arg2: i32) -> (i32, i32, i32, i32) {
    %c0_i32 = arith.constant 0 : i32
    %c0_i32_0 = arith.constant 0 : i32
    return %c0_i32, %arg2, %arg0, %arg1 : i32, i32, i32, i32
  }
}

</mosaic_0001>

<llo_original>
// kernel: squeeze.2
$region0: #{squeeze.2}
  %s0 = inlined_call_operand.vmem [shape: f32[1,2,4,144], index: 0, kind: input, shape index: {}]
  %s1 = inlined_call_operand.vmem [shape: f32[2,4,16,9], index: 1, kind: output, shape index: {}]
  $region1: #{squeeze.2} parent=0
    #allocation0 [shape = 'u8[16384]{0}', space=vmem, size = 0x4000, scoped, tag = 'scoped mem for input reshape']
    %s3 = sshll.u32 1, 4
    %s4 = ssub.s32 %s3, 1
    %s5 = smul.addr 4, 3
    %s6 = scalar_lea.vmem %s0, %s5
    %v7 = vld [vmem:[%s6] sm:%s4]
    %s8 = scalar_lea.vmem [#allocation0], 24
    %9 = vst [vmem:[%s8] sm:%s4] %v7
    %s10 = smul.addr 4, 2
    %s11 = scalar_lea.vmem %s0, %s10
    %v12 = vld [vmem:[%s11] sm:%s4]
    %s13 = scalar_lea.vmem [#allocation0], 16
    %14 = vst [vmem:[%s13] sm:%s4] %v12
    %s15 = scalar_lea.vmem %s0, 4
    %v16 = vld [vmem:[%s15] sm:%s4]
    %s17 = scalar_lea.vmem [#allocation0], 8
    %18 = vst [vmem:[%s17] sm:%s4] %v16
    %v19 = vld [vmem:[%s0] sm:%s4]
    %20 = vst [vmem:[#allocation0] sm:%s4] %v19
    %v21 = vld [vmem:[#allocation0] sm:$0xf]
    %vm22 = vcmask 72704
    %23 = vst.msk [vmem:[%s1] ss:$16 sm:$0x3] %vm22, %v21
    %24 = vst.msk [vmem:[%s1] ss:$16 sm:$0xc] %vm22, %v21
    %s25 = scalar_lea.vmem [#allocation0], 16
    %v26 = vld [vmem:[%s25] sm:$0xf]
    %vm27 = vcmask 72704
    %s28 = scalar_lea.vmem %s1, 64
    %29 = vst.msk [vmem:[%s28] ss:$16 sm:$0x3] %vm27, %v26
    %s30 = scalar_lea.vmem %s1, 64
    %31 = vst.msk [vmem:[%s30] ss:$16 sm:$0xc] %vm27, %v26
    %s32 = scalar_lea.vmem [#allocation0], 8
    %v33 = vld [vmem:[%s32] sm:$0xf]
    %s34 = scalar_lea.vmem [#allocation0], 20
    %v35 = vld [vmem:[%s34] sm:$0xf0]
    %vm36 = vcmask 1047556
    %v37 = vsel %vm36, %v35, %v33
    %38 = vrot.lane.b32.xlu0 %v37, 121
    %v39 = vpop.permute.xlu0 %38
    %vm40 = vcmask 72704
    %s41 = scalar_lea.vmem %s1, 15
    %42 = vst.msk [vmem:[%s41] ss:$16 sm:$0x3] %vm40, %v39
    %s43 = scalar_lea.vmem %s1, 15
    %44 = vst.msk [vmem:[%s43] ss:$16 sm:$0xc] %vm40, %v39
    %s45 = scalar_lea.vmem %s1, 15
    %46 = vst.msk [vmem:[%s45] ss:$16 sm:$0x30] %vm40, %v39
    %s47 = scalar_lea.vmem %s1, 15
    %48 = vst.msk [vmem:[%s47] ss:$16 sm:$0xc0] %vm40, %v39
    %v49 = vld [vmem:[#allocation0] sm:$0xf]
    %s50 = scalar_lea.vmem [#allocation0], 12
    %v51 = vld [vmem:[%s50] sm:$0xf0]
    %vm52 = vcmask 1047556
    %v53 = vsel %vm52, %v51, %v49
    %54 = vrot.lane.b32.xlu0 %v53, 119
    %v55 = vpop.permute.xlu0 %54
    %vm56 = vcmask 72704
    %s57 = scalar_lea.vmem %s1, 1
    %58 = vst.msk [vmem:[%s57] ss:$16 sm:$0x3] %vm56, %v55
    %s59 = scalar_lea.vmem %s1, 1
    %60 = vst.msk [vmem:[%s59] ss:$16 sm:$0xc] %vm56, %v55
    %s61 = scalar_lea.vmem %s1, 1
    %62 = vst.msk [vmem:[%s61] ss:$16 sm:$0x30] %vm56, %v55
    %s63 = scalar_lea.vmem %s1, 1
    %64 = vst.msk [vmem:[%s63] ss:$16 sm:$0xc0] %vm56, %v55
    %v65 = vld [vmem:[#allocation0] sm:$0xf]
    %s66 = scalar_lea.vmem [#allocation0], 12
    %v67 = vld [vmem:[%s66] sm:$0xf0]
    %vm68 = vcmask 1047556
    %v69 = vsel %vm68, %v67, %v65
    %70 = vrot.lane.b32.xlu0 %v69, 110
    %v71 = vpop.permute.xlu0 %70
    %vm72 = vcmask 72704
    %s73 = scalar_lea.vmem %s1, 2
    %74 = vst.msk [vmem:[%s73] ss:$16 sm:$0x3] %vm72, %v71
    %s75 = scalar_lea.vmem %s1, 2
    %76 = vst.msk [vmem:[%s75] ss:$16 sm:$0xc] %vm72, %v71
    %s77 = scalar_lea.vmem %s1, 2
    %78 = vst.msk [vmem:[%s77] ss:$16 sm:$0x30] %vm72, %v71
    %s79 = scalar_lea.vmem %s1, 2
    %80 = vst.msk [vmem:[%s79] ss:$16 sm:$0xc0] %vm72, %v71
    %v81 = vld [vmem:[#allocation0] sm:$0xf]
    %s82 = scalar_lea.vmem [#allocation0], 12
    %v83 = vld [vmem:[%s82] sm:$0xf0]
    %vm84 = vcmask 1047556
    %v85 = vsel %vm84, %v83, %v81
    %86 = vrot.lane.b32.xlu0 %v85, 101
    %v87 = vpop.permute.xlu0 %86
    %vm88 = vcmask 72704
    %s89 = scalar_lea.vmem %s1, 3
    %90 = vst.msk [vmem:[%s89] ss:$16 sm:$0x3] %vm88, %v87
    %s91 = scalar_lea.vmem %s1, 3
    %92 = vst.msk [vmem:[%s91] ss:$16 sm:$0xc] %vm88, %v87
    %s93 = scalar_lea.vmem %s1, 3
    %94 = vst.msk [vmem:[%s93] ss:$16 sm:$0x30] %vm88, %v87
    %s95 = scalar_lea.vmem %s1, 3
    %96 = vst.msk [vmem:[%s95] ss:$16 sm:$0xc0] %vm88, %v87
    %v97 = vld [vmem:[#allocation0] sm:$0xf]
    %s98 = scalar_lea.vmem [#allocation0], 12
    %v99 = vld [vmem:[%s98] sm:$0xf0]
    %vm100 = vcmask 1047556
    %v101 = vsel %vm100, %v99, %v97
    %102 = vrot.lane.b32.xlu0 %v101, 92
    %v103 = vpop.permute.xlu0 %102
    %vm104 = vcmask 72704
    %s105 = scalar_lea.vmem %s1, 4
    %106 = vst.msk [vmem:[%s105] ss:$16 sm:$0x3] %vm104, %v103
    %s107 = scalar_lea.vmem %s1, 4
    %108 = vst.msk [vmem:[%s107] ss:$16 sm:$0xc] %vm104, %v103
    %s109 = scalar_lea.vmem %s1, 4
    %110 = vst.msk [vmem:[%s109] ss:$16 sm:$0x30] %vm104, %v103
    %s111 = scalar_lea.vmem %s1, 4
    %112 = vst.msk [vmem:[%s111] ss:$16 sm:$0xc0] %vm104, %v103
    %v113 = vld [vmem:[#allocation0] sm:$0xf]
    %s114 = scalar_lea.vmem [#allocation0], 12
    %v115 = vld [vmem:[%s114] sm:$0xf0]
    %vm116 = vcmask 1047556
    %v117 = vsel %vm116, %v115, %v113
    %118 = vrot.lane.b32.xlu0 %v117, 83
    %v119 = vpop.permute.xlu0 %118
    %vm120 = vcmask 72704
    %s121 = scalar_lea.vmem %s1, 5
    %122 = vst.msk [vmem:[%s121] ss:$16 sm:$0x3] %vm120, %v119
    %s123 = scalar_lea.vmem %s1, 5
    %124 = vst.msk [vmem:[%s123] ss:$16 sm:$0xc] %vm120, %v119
    %s125 = scalar_lea.vmem %s1, 5
    %126 = vst.msk [vmem:[%s125] ss:$16 sm:$0x30] %vm120, %v119
    %s127 = scalar_lea.vmem %s1, 5
    %128 = vst.msk [vmem:[%s127] ss:$16 sm:$0xc0] %vm120, %v119
    %v129 = vld [vmem:[#allocation0] sm:$0xf]
    %s130 = scalar_lea.vmem [#allocation0], 12
    %v131 = vld [vmem:[%s130] sm:$0xf0]
    %vm132 = vcmask 1047556
    %v133 = vsel %vm132, %v131, %v129
    %134 = vrot.lane.b32.xlu0 %v133, 74
    %v135 = vpop.permute.xlu0 %134
    %vm136 = vcmask 72704
    %s137 = scalar_lea.vmem %s1, 6
    %138 = vst.msk [vmem:[%s137] ss:$16 sm:$0x3] %vm136, %v135
    %s139 = scalar_lea.vmem %s1, 6
    %140 = vst.msk [vmem:[%s139] ss:$16 sm:$0xc] %vm136, %v135
    %s141 = scalar_lea.vmem %s1, 6
    %142 = vst.msk [vmem:[%s141] ss:$16 sm:$0x30] %vm136, %v135
    %s143 = scalar_lea.vmem %s1, 6
    %144 = vst.msk [vmem:[%s143] ss:$16 sm:$0xc0] %vm136, %v135
    %v145 = vld [vmem:[#allocation0] sm:$0xf]
    %s146 = scalar_lea.vmem [#allocation0], 12
    %v147 = vld [vmem:[%s146] sm:$0xf0]
    %vm148 = vcmask 1047556
    %v149 = vsel %vm148, %v147, %v145
    %150 = vrot.lane.b32.xlu0 %v149, 65
    %v151 = vpop.permute.xlu0 %150
    %vm152 = vcmask 72704
    %s153 = scalar_lea.vmem %s1, 7
    %154 = vst.msk [vmem:[%s153] ss:$16 sm:$0x3] %vm152, %v151
    %s155 = scalar_lea.vmem %s1, 7
    %156 = vst.msk [vmem:[%s155] ss:$16 sm:$0xc] %vm152, %v151
    %s157 = scalar_lea.vmem %s1, 7
    %158 = vst.msk [vmem:[%s157] ss:$16 sm:$0x30] %vm152, %v151
    %s159 = scalar_lea.vmem %s1, 7
    %160 = vst.msk [vmem:[%s159] ss:$16 sm:$0xc0] %vm152, %v151
    %v161 = vld [vmem:[#allocation0] sm:$0xf]
    %s162 = scalar_lea.vmem [#allocation0], 12
    %v163 = vld [vmem:[%s162] sm:$0xf0]
    %vm164 = vcmask 1047556
    %v165 = vsel %vm164, %v163, %v161
    %166 = vrot.lane.b32.xlu0 %v165, 56
    %v167 = vpop.permute.xlu0 %166
    %vm168 = vcmask 72704
    %s169 = scalar_lea.vmem %s1, 8
    %170 = vst.msk [vmem:[%s169] ss:$16 sm:$0x3] %vm168, %v167
    %s171 = scalar_lea.vmem %s1, 8
    %172 = vst.msk [vmem:[%s171] ss:$16 sm:$0xc] %vm168, %v167
    %s173 = scalar_lea.vmem %s1, 8
    %174 = vst.msk [vmem:[%s173] ss:$16 sm:$0x30] %vm168, %v167
    %s175 = scalar_lea.vmem %s1, 8
    %176 = vst.msk [vmem:[%s175] ss:$16 sm:$0xc0] %vm168, %v167
    %v177 = vld [vmem:[#allocation0] sm:$0xf]
    %s178 = scalar_lea.vmem [#allocation0], 12
    %v179 = vld [vmem:[%s178] sm:$0xf0]
    %vm180 = vcmask 1047556
    %v181 = vsel %vm180, %v179, %v177
    %182 = vrot.lane.b32.xlu0 %v181, 47
    %v183 = vpop.permute.xlu0 %182
    %vm184 = vcmask 72704
    %s185 = scalar_lea.vmem %s1, 9
    %186 = vst.msk [vmem:[%s185] ss:$16 sm:$0x3] %vm184, %v183
    %s187 = scalar_lea.vmem %s1, 9
    %188 = vst.msk [vmem:[%s187] ss:$16 sm:$0xc] %vm184, %v183
    %s189 = scalar_lea.vmem %s1, 9
    %190 = vst.msk [vmem:[%s189] ss:$16 sm:$0x30] %vm184, %v183
    %s191 = scalar_lea.vmem %s1, 9
    %192 = vst.msk [vmem:[%s191] ss:$16 sm:$0xc0] %vm184, %v183
    %v193 = vld [vmem:[#allocation0] sm:$0xf]
    %s194 = scalar_lea.vmem [#allocation0], 12
    %v195 = vld [vmem:[%s194] sm:$0xf0]
    %vm196 = vcmask 1047556
    %v197 = vsel %vm196, %v195, %v193
    %198 = vrot.lane.b32.xlu0 %v197, 38
    %v199 = vpop.permute.xlu0 %198
    %vm200 = vcmask 72704
    %s201 = scalar_lea.vmem %s1, 10
    %202 = vst.msk [vmem:[%s201] ss:$16 sm:$0x3] %vm200, %v199
    %s203 = scalar_lea.vmem %s1, 10
    %204 = vst.msk [vmem:[%s203] ss:$16 sm:$0xc] %vm200, %v199
    %s205 = scalar_lea.vmem %s1, 10
    %206 = vst.msk [vmem:[%s205] ss:$16 sm:$0x30] %vm200, %v199
    %s207 = scalar_lea.vmem %s1, 10
    %208 = vst.msk [vmem:[%s207] ss:$16 sm:$0xc0] %vm200, %v199
    %v209 = vld [vmem:[#allocation0] sm:$0xf]
    %s210 = scalar_lea.vmem [#allocation0], 12
    %v211 = vld [vmem:[%s210] sm:$0xf0]
    %vm212 = vcmask 1047556
    %v213 = vsel %vm212, %v211, %v209
    %214 = vrot.lane.b32.xlu0 %v213, 29
    %v215 = vpop.permute.xlu0 %214
    %vm216 = vcmask 72704
    %s217 = scalar_lea.vmem %s1, 11
    %218 = vst.msk [vmem:[%s217] ss:$16 sm:$0x3] %vm216, %v215
    %s219 = scalar_lea.vmem %s1, 11
    %220 = vst.msk [vmem:[%s219] ss:$16 sm:$0xc] %vm216, %v215
    %s221 = scalar_lea.vmem %s1, 11
    %222 = vst.msk [vmem:[%s221] ss:$16 sm:$0x30] %vm216, %v215
    %s223 = scalar_lea.vmem %s1, 11
    %224 = vst.msk [vmem:[%s223] ss:$16 sm:$0xc0] %vm216, %v215
    %v225 = vld [vmem:[#allocation0] sm:$0xf]
    %s226 = scalar_lea.vmem [#allocation0], 12
    %v227 = vld [vmem:[%s226] sm:$0xf0]
    %vm228 = vcmask 1047556
    %v229 = vsel %vm228, %v227, %v225
    %230 = vrot.lane.b32.xlu0 %v229, 20
    %v231 = vpop.permute.xlu0 %230
    %vm232 = vcmask 72704
    %s233 = scalar_lea.vmem %s1, 12
    %234 = vst.msk [vmem:[%s233] ss:$16 sm:$0x3] %vm232, %v231
    %s235 = scalar_lea.vmem %s1, 12
    %236 = vst.msk [vmem:[%s235] ss:$16 sm:$0xc] %vm232, %v231
    %s237 = scalar_lea.vmem %s1, 12
    %238 = vst.msk [vmem:[%s237] ss:$16 sm:$0x30] %vm232, %v231
    %s239 = scalar_lea.vmem %s1, 12
    %240 = vst.msk [vmem:[%s239] ss:$16 sm:$0xc0] %vm232, %v231
    %v241 = vld [vmem:[#allocation0] sm:$0xf]
    %s242 = scalar_lea.vmem [#allocation0], 12
    %v243 = vld [vmem:[%s242] sm:$0xf0]
    %vm244 = vcmask 1047556
    %v245 = vsel %vm244, %v243, %v241
    %246 = vrot.lane.b32.xlu0 %v245, 11
    %v247 = vpop.permute.xlu0 %246
    %vm248 = vcmask 72704
    %s249 = scalar_lea.vmem %s1, 13
    %250 = vst.msk [vmem:[%s249] ss:$16 sm:$0x3] %vm248, %v247
    %s251 = scalar_lea.vmem %s1, 13
    %252 = vst.msk [vmem:[%s251] ss:$16 sm:$0xc] %vm248, %v247
    %s253 = scalar_lea.vmem %s1, 13
    %254 = vst.msk [vmem:[%s253] ss:$16 sm:$0x30] %vm248, %v247
    %s255 = scalar_lea.vmem %s1, 13
    %256 = vst.msk [vmem:[%s255] ss:$16 sm:$0xc0] %vm248, %v247
    %v257 = vld [vmem:[#allocation0] sm:$0xf]
    %s258 = scalar_lea.vmem [#allocation0], 12
    %v259 = vld [vmem:[%s258] sm:$0xf0]
    %vm260 = vcmask 1047556
    %v261 = vsel %vm260, %v259, %v257
    %s262 = scalar_lea.vmem [#allocation0], 8
    %v263 = vld [vmem:[%s262] sm:$0xf]
    %s264 = scalar_lea.vmem [#allocation0], 20
    %v265 = vld [vmem:[%s264] sm:$0xf0]
    %vm266 = vcmask 1047556
    %v267 = vsel %vm266, %v265, %v263
    %vm268 = vcmask 1031168
    %v269 = vsel %vm268, %v267, %v261
    %270 = vrot.lane.b32.xlu0 %v269, 2
    %v271 = vpop.permute.xlu0 %270
    %vm272 = vcmask 15360
    %s273 = scalar_lea.vmem %s1, 14
    %274 = vst.msk [vmem:[%s273] ss:$16 sm:$0x3] %vm272, %v271
    %s275 = scalar_lea.vmem %s1, 14
    %276 = vst.msk [vmem:[%s275] ss:$16 sm:$0xc] %vm272, %v271
    %s277 = scalar_lea.vmem %s1, 14
    %278 = vst.msk [vmem:[%s277] ss:$16 sm:$0x30] %vm272, %v271
    %s279 = scalar_lea.vmem %s1, 14
    %280 = vst.msk [vmem:[%s279] ss:$16 sm:$0xc0] %vm272, %v271
    %vm281 = vcmask 72720
    %s282 = scalar_lea.vmem %s1, 14
    %283 = vst.msk [vmem:[%s282] ss:$16 sm:$0x3] %vm281, %v271
    %s284 = scalar_lea.vmem %s1, 14
    %285 = vst.msk [vmem:[%s284] ss:$16 sm:$0xc] %vm281, %v271
    %s286 = scalar_lea.vmem %s1, 14
    %287 = vst.msk [vmem:[%s286] ss:$16 sm:$0x30] %vm281, %v271
    %s288 = scalar_lea.vmem %s1, 14
    %289 = vst.msk [vmem:[%s288] ss:$16 sm:$0xc0] %vm281, %v271

// kernel: spectral_conv_s2_forward.1
$region0: #{spectral_conv_s2_forward.1}
  #allocation0 [shape = 'u32[]', space=smem, size = 0x4, offset = 0x4, fixed_abs, tag = 'smem constant byte address 0x4 - core index']
  #allocation1 [shape = 'u32[144,128]{1,0:T(1,128)}', space=vmem, size = 0x12000, scoped, tag = 'internal scratch']
  %s0 = inlined_call_operand.vmem [shape: f32[2,2,4,256], index: 0, kind: input, shape index: {}]
  %s1 = inlined_call_operand.vmem [shape: bf16[2,4,8,256], index: 1, kind: input, shape index: {}]
  %s2 = inlined_call_operand.vmem [shape: f32[2,2,8,256], index: 2, kind: output, shape index: {}]
  %s3 = sld [smem:[#allocation0]]
  $region98: #{spectral_conv_s2_forward.1} parent=0
    _
  %s5 = ssub.s32 1, %s3
  %s6 = scalar_select 0, %s5, %s3
  $region1: #{spectral_conv_s2_forward.1} parent=0
    #allocation2 [shape = 'u8[16384]{0}', space=vmem, size = 0x4000, scoped, tag = 'input window, operand 0']
    #allocation3 [shape = 'u8[32768]{0}', space=vmem, size = 0x8000, scoped, tag = 'output window, operand 0']
    loop: start=0, step=1, limit=4
    $region2: #{spectral_conv_s2_forward.1} parent=1 // loop_pre_header
      _
    $region3: #{spectral_conv_s2_forward.1} parent=1 // loop_header
      %s8 = sphi 0, %s12
      %p9 = scmp.ge.s32.totalorder %s8, 4
      %s15 = sphi 0, %s34
      %s16 = sphi 0, %s30
      %s17 = sphi 0, %s26
      %s18 = sphi 0, %s15
      %s19 = sphi 0, %s16
      %s20 = sphi 0, %s17
      %s21 = sphi 0, %s18
      %s22 = sphi 0, %s19
      %s23 = sphi 0, %s20
      %s39 = sphi 0, %s41
      %s42 = sphi 0, %s39
      %s43 = sphi 0, %s42
      %s59 = sphi 0, %s43
      %s67 = sphi 0, %s69
      %s70 = sphi 0, %s67
      %s71 = sphi 0, %s70
      %s87 = sphi 0, %s71
      %s97 = sphi 0, %s99
      %s100 = sphi 0, %s97
      %s101 = sphi 0, %s100
      %s117 = sphi 0, %s101
    $region4: #{spectral_conv_s2_forward.1} parent=1 // loop_header_branch
      %11 = sbr.rel (%p9) target = $region8
    $region5: #{spectral_conv_s2_forward.1} parent=1 // loop_body
      %s13 = ssub.s32 %s8, 1
      %s14 = ssub.s32 %s8, 2
      %s24 = sadd.s32 1, %s17
      %p25 = scmp.ge.s32.totalorder %s24, 2
      %s26 = scalar_select %p25, 0, %s24
      %s27 = sadd.s32 1, %s16
      %s28 = scalar_select %p25, %s27, %s16
      %p29 = scmp.ge.s32.totalorder %s28, 1
      %s30 = scalar_select %p29, 0, %s28
      %s31 = sadd.s32 1, %s15
      %s32 = scalar_select %p29, %s31, %s15
      %p33 = scmp.ge.s32.totalorder %s32, 1
      %s34 = scalar_select %p33, 0, %s32
      %s35 = ssub.s32 %s17, %s26
      %s36 = ssub.s32 %s16, %s30
      %s37 = sor.u32 %s35, %s36
      %p38 = scmp.eq.s32.totalorder %s37, 0
      %s40 = sadd.s32 %s39, 1
      %s41 = scalar_select %p38, %s39, %s40
      %p44 = pneg %p38
      %p45 = scmp.eq.s32.totalorder %s8, 1
      %p46 = por %p44, %p45
      %p47 = scmp.ne.s32.totalorder %s39, %s42
      %p48 = scmp.eq.s32.totalorder %s8, 0
      %p49 = por %p47, %p48
      %p50 = scmp.ne.s32.totalorder %s39, %s42
      %p51 = scmp.eq.s32.totalorder %s13, 1
      %p52 = por %p50, %p51
      %p53 = scmp.ne.s32.totalorder %s42, %s43
      %p54 = scmp.eq.s32.totalorder %s13, 0
      %p55 = por %p53, %p54
      %p56 = scmp.ne.s32.totalorder %s42, %s43
      %p57 = scmp.eq.s32.totalorder %s14, 1
      %p58 = por %p56, %p57
      %p60 = scmp.ne.s32.totalorder %s43, %s59
      %p61 = scmp.eq.s32.totalorder %s14, 0
      %p62 = por %p60, %p61
      %s63 = ssub.s32 %s15, %s34
      %s64 = ssub.s32 %s16, %s30
      %s65 = sor.u32 %s63, %s64
      %p66 = scmp.eq.s32.totalorder %s65, 0
      %s68 = sadd.s32 %s67, 1
      %s69 = scalar_select %p66, %s67, %s68
      %p72 = pneg %p66
      %p73 = scmp.eq.s32.totalorder %s8, 1
      %p74 = por %p72, %p73
      %p75 = scmp.ne.s32.totalorder %s67, %s70
      %p76 = scmp.eq.s32.totalorder %s8, 0
      %p77 = por %p75, %p76
      %p78 = scmp.ne.s32.totalorder %s67, %s70
      %p79 = scmp.eq.s32.totalorder %s13, 1
      %p80 = por %p78, %p79
      %p81 = scmp.ne.s32.totalorder %s70, %s71
      %p82 = scmp.eq.s32.totalorder %s13, 0
      %p83 = por %p81, %p82
      %p84 = scmp.ne.s32.totalorder %s70, %s71
      %p85 = scmp.eq.s32.totalorder %s14, 1
      %p86 = por %p84, %p85
      %p88 = scmp.ne.s32.totalorder %s71, %s87
      %p89 = scmp.eq.s32.totalorder %s14, 0
      %p90 = por %p88, %p89
      %s91 = ssub.s32 %s17, %s26
      %s92 = ssub.s32 %s15, %s34
      %s93 = sor.u32 %s91, %s92
      %s94 = ssub.s32 %s16, %s30
      %s95 = sor.u32 %s93, %s94
      %p96 = scmp.eq.s32.totalorder %s95, 0
      %s98 = sadd.s32 %s97, 1
      %s99 = scalar_select %p96, %s97, %s98
      %p102 = pneg %p96
      %p103 = scmp.eq.s32.totalorder %s8, 1
      %p104 = por %p102, %p103
      %p105 = scmp.ne.s32.totalorder %s97, %s100
      %p106 = scmp.eq.s32.totalorder %s8, 0
      %p107 = por %p105, %p106
      %p108 = scmp.ne.s32.totalorder %s97, %s100
      %p109 = scmp.eq.s32.totalorder %s13, 1
      %p110 = por %p108, %p109
      %p111 = scmp.ne.s32.totalorder %s100, %s101
      %p112 = scmp.eq.s32.totalorder %s13, 0
      %p113 = por %p111, %p112
      %p114 = scmp.ne.s32.totalorder %s100, %s101
      %p115 = scmp.eq.s32.totalorder %s14, 1
      %p116 = por %p114, %p115
      %p118 = scmp.ne.s32.totalorder %s101, %s117
      %p119 = scmp.eq.s32.totalorder %s14, 0
      %p120 = por %p118, %p119
      %p121 = scmp.le.s32.totalorder 1, %s8
      %p122 = scmp.lt.s32.totalorder %s8, 3
      %p123 = pnand %p121, %p122
      %p124 = pneg %p123
      // Predicated region
      $region9: #{spectral_conv_s2_forward.1} parent=5 // pred_check
        _
      $region10: #{spectral_conv_s2_forward.1} parent=5 // pred_check_branch
        %126 = sbr.rel (%p123) target = $region12
      $region11: #{spectral_conv_s2_forward.1} parent=5 // pred_region
        %s127 = ssub.s32 %s8, 1
        // Predicated region
        $region13: #{spectral_conv_s2_forward.1} parent=11 // pred_check
          %p128 = pneg %p83
        $region14: #{spectral_conv_s2_forward.1} parent=11 // pred_check_branch
          %130 = sbr.rel (%p128) target = $region16
        $region15: #{spectral_conv_s2_forward.1} parent=11 // pred_region
          %s131 = smul.u32 2, %s19
          %p132 = scmp.lt.s32.totalorder %s18, 0
          %s133 = scalar_select %p132, %s18, 0
          %p134 = scmp.lt.s32.totalorder %s131, 1
          %s135 = scalar_select %p134, %s131, 1
          %s136 = smul.addr %s133, 2
          %s137 = sadd.s32 %s135, %s136
          %s138 = smul.addr %s137, 4
          %s139 = scalar_lea.vmem %s1, %s138
          %s140 = smul.u32 2, %s19
        $region16: #{spectral_conv_s2_forward.1} parent=11 // pred_fallthru
          _
      $region12: #{spectral_conv_s2_forward.1} parent=5 // pred_fallthru
        _
      %p141 = scmp.lt.s32.totalorder %s8, 2
      // Predicated region
      $region17: #{spectral_conv_s2_forward.1} parent=5 // pred_check
        %p142 = pneg %p141
      $region18: #{spectral_conv_s2_forward.1} parent=5 // pred_check_branch
        %144 = sbr.rel (%p142) target = $region20
      $region19: #{spectral_conv_s2_forward.1} parent=5 // pred_region
        // Predicated region
        $region21: #{spectral_conv_s2_forward.1} parent=19 // pred_check
          %p145 = pneg %p49
        $region22: #{spectral_conv_s2_forward.1} parent=19 // pred_check_branch
          %147 = sbr.rel (%p145) target = $region24
        $region23: #{spectral_conv_s2_forward.1} parent=19 // pred_region
          %s148 = sand.u32 %s39, 1
          %s149 = sand.u32 %s39, 1
          %s150 = smul.addr %s149, 16
          %s151 = scalar_lea.vmem [#allocation2], %s150
          %s152 = smul.u32 2, %s16
          %s153 = smul.addr %s17, 2
          %s154 = sadd.s32 %s152, %s153
          %s155 = smul.addr %s154, 4
          %s156 = scalar_lea.vmem %s0, %s155
          // Predicated region
          $region25: #{spectral_conv_s2_forward.1} parent=23 // pred_check
            _
          $region26: #{spectral_conv_s2_forward.1} parent=23 // pred_check_branch
            %158 = sbr.rel (0) target = $region28
          $region27: #{spectral_conv_s2_forward.1} parent=23 // pred_region
            // Predicated region
            $region29: #{spectral_conv_s2_forward.1} parent=27 // pred_check
              _
            $region30: #{spectral_conv_s2_forward.1} parent=27 // pred_check_branch
              %160 = sbr.rel (0) target = $region32
            $region31: #{spectral_conv_s2_forward.1} parent=27 // pred_region
              // Predicated region
              $region44: #{spectral_conv_s2_forward.1} parent=31 // pred_check
                _
              $region45: #{spectral_conv_s2_forward.1} parent=31 // pred_check_branch
                %178 = sbr.rel (0) target = $region47
              $region46: #{spectral_conv_s2_forward.1} parent=31 // pred_region
                loop: start=0, step=1, limit=1
                $region48: #{spectral_conv_s2_forward.1} parent=46 // loop_pre_header
                  _
                $region49: #{spectral_conv_s2_forward.1} parent=46 // loop_header
                  %s180 = sphi 0, %s184
                  %p181 = scmp.ge.s32.totalorder %s180, 1
                  %s185 = sphi %s156, %s156
                  %s186 = sphi %s151, %s151
                $region50: #{spectral_conv_s2_forward.1} parent=46 // loop_header_branch
                  %183 = sbr.rel (%p181) target = $region54
                $region51: #{spectral_conv_s2_forward.1} parent=46 // loop_body
                  %v187 = vld [vmem:[%s185] sm:$0xff]
                  %188 = vst [vmem:[%s186] sm:$0xff] %v187
                  %v189 = vld [vmem:[%s185 + $0x10] sm:$0xff]
                  %190 = vst [vmem:[%s186 + $0x8] sm:$0xff] %v189
                $region52: #{spectral_conv_s2_forward.1} parent=46 // loop_footer
                  %s184 = sadd.s32 1, %s180
                $region53: #{spectral_conv_s2_forward.1} parent=46 // loop_footer_branch
                  %179 = sbr.rel target = $region49
                $region54: #{spectral_conv_s2_forward.1} parent=46 // loop_exit
                  _
              $region47: #{spectral_conv_s2_forward.1} parent=31 // pred_fallthru
                _
              // Predicated region
              $region55: #{spectral_conv_s2_forward.1} parent=31 // pred_check
                _
              $region56: #{spectral_conv_s2_forward.1} parent=31 // pred_check_branch
                %192 = sbr.rel target = $region58
              $region57: #{spectral_conv_s2_forward.1} parent=31 // pred_region
                _
              $region58: #{spectral_conv_s2_forward.1} parent=31 // pred_fallthru
                _
            $region32: #{spectral_conv_s2_forward.1} parent=27 // pred_fallthru
              _
            // Predicated region
            $region33: #{spectral_conv_s2_forward.1} parent=27 // pred_check
              _
            $region34: #{spectral_conv_s2_forward.1} parent=27 // pred_check_branch
              %162 = sbr.rel target = $region36
            $region35: #{spectral_conv_s2_forward.1} parent=27 // pred_region
              %s164 = ssub.s32 256, 1
              loop: start=0, step=1, limit=1
              $region37: #{spectral_conv_s2_forward.1} parent=35 // loop_pre_header
                _
              $region38: #{spectral_conv_s2_forward.1} parent=35 // loop_header
                %s166 = sphi 0, %s170
                %p167 = scmp.ge.s32.totalorder %s166, 1
                %s171 = sphi %s156, %s156
                %s172 = sphi %s151, %s151
              $region39: #{spectral_conv_s2_forward.1} parent=35 // loop_header_branch
                %169 = sbr.rel (%p167) target = $region43
              $region40: #{spectral_conv_s2_forward.1} parent=35 // loop_body
                %v173 = vld [vmem:[%s171] sm:%s164]
                %174 = vst [vmem:[%s172] sm:%s164] %v173
                %v175 = vld [vmem:[%s171 + $0x10] sm:%s164]
                %176 = vst [vmem:[%s172 + $0x8] sm:%s164] %v175
              $region41: #{spectral_conv_s2_forward.1} parent=35 // loop_footer
                %s170 = sadd.s32 1, %s166
              $region42: #{spectral_conv_s2_forward.1} parent=35 // loop_footer_branch
                %165 = sbr.rel target = $region38
              $region43: #{spectral_conv_s2_forward.1} parent=35 // loop_exit
                _
            $region36: #{spectral_conv_s2_forward.1} parent=27 // pred_fallthru
              _
          $region28: #{spectral_conv_s2_forward.1} parent=23 // pred_fallthru
            _
          %193 = vnop
        $region24: #{spectral_conv_s2_forward.1} parent=19 // pred_fallthru
          _
      $region20: #{spectral_conv_s2_forward.1} parent=5 // pred_fallthru
        _
      %p194 = scmp.le.s32.totalorder 1, %s8
      %p195 = scmp.lt.s32.totalorder %s8, 3
      %p196 = pnand %p194, %p195
      %p197 = pneg %p196
      // Predicated region
      $region59: #{spectral_conv_s2_forward.1} parent=5 // pred_check
        _
      $region60: #{spectral_conv_s2_forward.1} parent=5 // pred_check_branch
        %199 = sbr.rel (%p196) target = $region62
      $region61: #{spectral_conv_s2_forward.1} parent=5 // pred_region
        %s200 = ssub.s32 %s8, 1
        %s201 = sand.u32 %s42, 1
        %s202 = sand.u32 %s42, 1
        %s203 = smul.addr %s202, 16
        %s204 = scalar_lea.vmem [#allocation2], %s203
        // Predicated region
        $region63: #{spectral_conv_s2_forward.1} parent=61 // pred_check
          %p205 = pneg %p55
        $region64: #{spectral_conv_s2_forward.1} parent=61 // pred_check_branch
          %207 = sbr.rel (%p205) target = $region66
        $region65: #{spectral_conv_s2_forward.1} parent=61 // pred_region
          _
        $region66: #{spectral_conv_s2_forward.1} parent=61 // pred_fallthru
          _
        %s208 = sand.u32 %s42, 1
        %s209 = sand.u32 %s42, 1
        %s210 = smul.addr %s209, 16
        %s211 = scalar_lea.vmem [#allocation2], %s210
        %p212 = pneg %p55
        %p213 = pneg %p52
        %s214 = smul.u32 2, %s19
        %p215 = scmp.lt.s32.totalorder %s18, 0
        %s216 = scalar_select %p215, %s18, 0
        %p217 = scmp.lt.s32.totalorder %s214, 1
        %s218 = scalar_select %p217, %s214, 1
        %s219 = smul.addr %s216, 2
        %s220 = sadd.s32 %s218, %s219
        %s221 = smul.addr %s220, 4
        %s222 = scalar_lea.vmem %s1, %s221
        %p223 = pneg %p83
        %p224 = pneg %p80
        %p225 = pneg %p113
        %p226 = pneg %p110
        %s227 = sand.u32 %s100, 1
        %s228 = sand.u32 %s100, 1
        %s229 = smul.addr %s228, 32
        %s230 = scalar_lea.vmem [#allocation3], %s229
        %s231 = smul.u32 2, %s19
        %s232 = smul.u32 2, %s19
        %p233 = scmp.lt.s32.totalorder %s18, 0
        %s234 = scalar_select %p233, %s18, 0
        %p235 = scmp.lt.s32.totalorder %s232, 1
        %s236 = scalar_select %p235, %s232, 1
        %s237 = smul.addr %s234, 2
        %s238 = sadd.s32 %s236, %s237
        %s239 = smul.addr %s238, 4
        %s240 = scalar_lea.vmem %s1, %s239
        %s241 = smul.u32 2, %s19
        %s242 = smul.u32 2, %s19
        %v243 = vld [vmem:[%s204] ss:$4 sm:$0x3]
        %s244 = scalar_lea.vmem %s204, 8 [#allocation2]
        %v245 = vld [vmem:[%s244] ss:$4 sm:$0x3]
        %v246 = vld [vmem:[%s240] sm:$0xff]
        %v247 = vunpack.c.l.bf16 %v246
        %v248 = vunpack.c.h.bf16 %v246
        %s249 = scalar_lea.vmem %s240, 32
        %v250 = vld [vmem:[%s249] sm:$0xff]
        %v251 = vunpack.c.l.bf16 %v250
        %v252 = vunpack.c.h.bf16 %v250
        %v254 = vlaneseq
        %v255 = vshrl.u32 %v254, 7
        %v256 = vsub.s32 0, %v255
        %v257 = vrot.slane %v243, %v256
        %v258 = vlaneseq
        %v259 = vshrl.u32 %v258, 7
        %v260 = vsub.s32 1, %v259
        %v261 = vrot.slane %v243, %v260
        %v264 = vmul.f32 %v257, %v247
        %v265 = vmul.f32 %v261, %v248
        %v267 = vlaneseq
        %v268 = vshrl.u32 %v267, 7
        %v269 = vsub.s32 0, %v268
        %v270 = vrot.slane %v245, %v269
        %v271 = vlaneseq
        %v272 = vshrl.u32 %v271, 7
        %v273 = vsub.s32 1, %v272
        %v274 = vrot.slane %v245, %v273
        %v277 = vmul.f32 %v270, %v251
        %v278 = vmul.f32 %v274, %v252
        %v279 = vsub.f32 %v264, %v277
        %v280 = vsub.f32 %v265, %v278
        %v281 = vadd.f32 %v279, 0.0
        %v282 = vadd.f32 %v280, 0.0
        %v283 = vmul.f32 %v257, %v251
        %v284 = vmul.f32 %v261, %v252
        %v285 = vmul.f32 %v270, %v247
        %v286 = vmul.f32 %v274, %v248
        %v287 = vadd.f32 %v283, %v285
        %v288 = vadd.f32 %v284, %v286
        %v289 = vadd.f32 %v287, 0.0
        %v290 = vadd.f32 %v288, 0.0
        %s291 = scalar_lea.vmem %s204, 1 [#allocation2]
        %v292 = vld [vmem:[%s291] ss:$4 sm:$0x3]
        %s293 = scalar_lea.vmem %s244, 1 [#allocation2]
        %v294 = vld [vmem:[%s293] ss:$4 sm:$0x3]
        %s295 = scalar_lea.vmem %s240, 8
        %v296 = vld [vmem:[%s295] sm:$0xff]
        %v297 = vunpack.c.l.bf16 %v296
        %v298 = vunpack.c.h.bf16 %v296
        %s299 = scalar_lea.vmem %s240, 40
        %v300 = vld [vmem:[%s299] sm:$0xff]
        %v301 = vunpack.c.l.bf16 %v300
        %v302 = vunpack.c.h.bf16 %v300
        %v304 = vlaneseq
        %v305 = vshrl.u32 %v304, 7
        %v306 = vsub.s32 0, %v305
        %v307 = vrot.slane %v292, %v306
        %v308 = vlaneseq
        %v309 = vshrl.u32 %v308, 7
        %v310 = vsub.s32 1, %v309
        %v311 = vrot.slane %v292, %v310
        %v314 = vmul.f32 %v307, %v297
        %v315 = vmul.f32 %v311, %v298
        %v317 = vlaneseq
        %v318 = vshrl.u32 %v317, 7
        %v319 = vsub.s32 0, %v318
        %v320 = vrot.slane %v294, %v319
        %v321 = vlaneseq
        %v322 = vshrl.u32 %v321, 7
        %v323 = vsub.s32 1, %v322
        %v324 = vrot.slane %v294, %v323
        %v327 = vmul.f32 %v320, %v301
        %v328 = vmul.f32 %v324, %v302
        %v329 = vsub.f32 %v314, %v327
        %v330 = vsub.f32 %v315, %v328
        %v331 = vadd.f32 %v281, %v329
        %v332 = vadd.f32 %v282, %v330
        %v333 = vmul.f32 %v307, %v301
        %v334 = vmul.f32 %v311, %v302
        %v335 = vmul.f32 %v320, %v297
        %v336 = vmul.f32 %v324, %v298
        %v337 = vadd.f32 %v333, %v335
        %v338 = vadd.f32 %v334, %v336
        %v339 = vadd.f32 %v289, %v337
        %v340 = vadd.f32 %v290, %v338
        %s341 = scalar_lea.vmem %s204, 2 [#allocation2]
        %v342 = vld [vmem:[%s341] ss:$4 sm:$0x3]
        %s343 = scalar_lea.vmem %s244, 2 [#allocation2]
        %v344 = vld [vmem:[%s343] ss:$4 sm:$0x3]
        %s345 = scalar_lea.vmem %s240, 16
        %v346 = vld [vmem:[%s345] sm:$0xff]
        %v347 = vunpack.c.l.bf16 %v346
        %v348 = vunpack.c.h.bf16 %v346
        %s349 = scalar_lea.vmem %s240, 48
        %v350 = vld [vmem:[%s349] sm:$0xff]
        %v351 = vunpack.c.l.bf16 %v350
        %v352 = vunpack.c.h.bf16 %v350
        %v354 = vlaneseq
        %v355 = vshrl.u32 %v354, 7
        %v356 = vsub.s32 0, %v355
        %v357 = vrot.slane %v342, %v356
        %v358 = vlaneseq
        %v359 = vshrl.u32 %v358, 7
        %v360 = vsub.s32 1, %v359
        %v361 = vrot.slane %v342, %v360
        %v364 = vmul.f32 %v357, %v347
        %v365 = vmul.f32 %v361, %v348
        %v367 = vlaneseq
        %v368 = vshrl.u32 %v367, 7
        %v369 = vsub.s32 0, %v368
        %v370 = vrot.slane %v344, %v369
        %v371 = vlaneseq
        %v372 = vshrl.u32 %v371, 7
        %v373 = vsub.s32 1, %v372
        %v374 = vrot.slane %v344, %v373
        %v377 = vmul.f32 %v370, %v351
        %v378 = vmul.f32 %v374, %v352
        %v379 = vsub.f32 %v364, %v377
        %v380 = vsub.f32 %v365, %v378
        %v381 = vadd.f32 %v331, %v379
        %v382 = vadd.f32 %v332, %v380
        %v383 = vmul.f32 %v357, %v351
        %v384 = vmul.f32 %v361, %v352
        %v385 = vmul.f32 %v370, %v347
        %v386 = vmul.f32 %v374, %v348
        %v387 = vadd.f32 %v383, %v385
        %v388 = vadd.f32 %v384, %v386
        %v389 = vadd.f32 %v339, %v387
        %v390 = vadd.f32 %v340, %v388
        %s391 = scalar_lea.vmem %s204, 3 [#allocation2]
        %v392 = vld [vmem:[%s391] ss:$4 sm:$0x3]
        %s393 = scalar_lea.vmem %s244, 3 [#allocation2]
        %v394 = vld [vmem:[%s393] ss:$4 sm:$0x3]
        %s395 = scalar_lea.vmem %s240, 24
        %v396 = vld [vmem:[%s395] sm:$0xff]
        %v397 = vunpack.c.l.bf16 %v396
        %v398 = vunpack.c.h.bf16 %v396
        %s399 = scalar_lea.vmem %s240, 56
        %v400 = vld [vmem:[%s399] sm:$0xff]
        %v401 = vunpack.c.l.bf16 %v400
        %v402 = vunpack.c.h.bf16 %v400
        %v404 = vlaneseq
        %v405 = vshrl.u32 %v404, 7
        %v406 = vsub.s32 0, %v405
        %v407 = vrot.slane %v392, %v406
        %v408 = vlaneseq
        %v409 = vshrl.u32 %v408, 7
        %v410 = vsub.s32 1, %v409
        %v411 = vrot.slane %v392, %v410
        %v414 = vmul.f32 %v407, %v397
        %v415 = vmul.f32 %v411, %v398
        %v417 = vlaneseq
        %v418 = vshrl.u32 %v417, 7
        %v419 = vsub.s32 0, %v418
        %v420 = vrot.slane %v394, %v419
        %v421 = vlaneseq
        %v422 = vshrl.u32 %v421, 7
        %v423 = vsub.s32 1, %v422
        %v424 = vrot.slane %v394, %v423
        %v427 = vmul.f32 %v420, %v401
        %v428 = vmul.f32 %v424, %v402
        %v429 = vsub.f32 %v414, %v427
        %v430 = vsub.f32 %v415, %v428
        %v431 = vadd.f32 %v381, %v429
        %v432 = vadd.f32 %v382, %v430
        %v433 = vmul.f32 %v407, %v401
        %v434 = vmul.f32 %v411, %v402
        %v435 = vmul.f32 %v420, %v397
        %v436 = vmul.f32 %v424, %v398
        %v437 = vadd.f32 %v433, %v435
        %v438 = vadd.f32 %v434, %v436
        %v439 = vadd.f32 %v389, %v437
        %v440 = vadd.f32 %v390, %v438
        %441 = vst [vmem:[%s230] sm:$0xff] %v431
        %442 = vst [vmem:[%s230 + $0x8] sm:$0xff] %v432
        %s443 = scalar_lea.vmem %s230, 16 [#allocation3]
        %444 = vst [vmem:[%s443] sm:$0xff] %v439
        %445 = vst [vmem:[%s443 + $0x8] sm:$0xff] %v440
        %s446 = sand.u32 %s100, 1
        %s447 = sand.u32 %s100, 1
        %s448 = smul.addr %s447, 32
        %s449 = scalar_lea.vmem [#allocation3], %s448
        // Predicated region
        $region67: #{spectral_conv_s2_forward.1} parent=61 // pred_check
          %p450 = pneg %p110
        $region68: #{spectral_conv_s2_forward.1} parent=61 // pred_check_branch
          %452 = sbr.rel (%p450) target = $region70
        $region69: #{spectral_conv_s2_forward.1} parent=61 // pred_region
          %s453 = smul.u32 2, %s19
          %s454 = smul.addr %s18, 2
          %s455 = sadd.s32 %s453, %s454
          %s456 = smul.addr %s20, 2
          %s457 = sadd.s32 %s455, %s456
          %s458 = smul.addr %s457, 8
          %s459 = scalar_lea.vmem %s2, %s458
          // Predicated region
          $region71: #{spectral_conv_s2_forward.1} parent=69 // pred_check
            _
          $region72: #{spectral_conv_s2_forward.1} parent=69 // pred_check_branch
            %461 = sbr.rel (0) target = $region74
          $region73: #{spectral_conv_s2_forward.1} parent=69 // pred_region
            // Predicated region
            $region75: #{spectral_conv_s2_forward.1} parent=73 // pred_check
              _
            $region76: #{spectral_conv_s2_forward.1} parent=73 // pred_check_branch
              %463 = sbr.rel (0) target = $region78
            $region77: #{spectral_conv_s2_forward.1} parent=73 // pred_region
              loop: start=0, step=1, limit=1
              $region79: #{spectral_conv_s2_forward.1} parent=77 // loop_pre_header
                _
              $region80: #{spectral_conv_s2_forward.1} parent=77 // loop_header
                %s465 = sphi 0, %s469
                %p466 = scmp.ge.s32.totalorder %s465, 1
                %s470 = sphi %s449, %s449
                %s471 = sphi %s459, %s459
              $region81: #{spectral_conv_s2_forward.1} parent=77 // loop_header_branch
                %468 = sbr.rel (%p466) target = $region85
              $region82: #{spectral_conv_s2_forward.1} parent=77 // loop_body
                %v472 = vld [vmem:[%s470] sm:$0xff]
                %473 = vst [vmem:[%s471] sm:$0xff] %v472
                %v474 = vld [vmem:[%s470 + $0x8] sm:$0xff]
                %475 = vst [vmem:[%s471 + $0x8] sm:$0xff] %v474
                %v476 = vld [vmem:[%s470 + $0x10] sm:$0xff]
                %477 = vst [vmem:[%s471 + $0x20] sm:$0xff] %v476
                %v478 = vld [vmem:[%s470 + $0x18] sm:$0xff]
                %479 = vst [vmem:[%s471 + $0x28] sm:$0xff] %v478
              $region83: #{spectral_conv_s2_forward.1} parent=77 // loop_footer
                %s469 = sadd.s32 1, %s465
              $region84: #{spectral_conv_s2_forward.1} parent=77 // loop_footer_branch
                %464 = sbr.rel target = $region80
              $region85: #{spectral_conv_s2_forward.1} parent=77 // loop_exit
                _
            $region78: #{spectral_conv_s2_forward.1} parent=73 // pred_fallthru
              _
            // Predicated region
            $region86: #{spectral_conv_s2_forward.1} parent=73 // pred_check
              _
            $region87: #{spectral_conv_s2_forward.1} parent=73 // pred_check_branch
              %481 = sbr.rel target = $region89
            $region88: #{spectral_conv_s2_forward.1} parent=73 // pred_region
              _
            $region89: #{spectral_conv_s2_forward.1} parent=73 // pred_fallthru
              _
          $region74: #{spectral_conv_s2_forward.1} parent=69 // pred_fallthru
            _
          %482 = vnop
        $region70: #{spectral_conv_s2_forward.1} parent=61 // pred_fallthru
          _
      $region62: #{spectral_conv_s2_forward.1} parent=5 // pred_fallthru
        _
      %p483 = scmp.le.s32.totalorder 2, %s8
      // Predicated region
      $region90: #{spectral_conv_s2_forward.1} parent=5 // pred_check
        %p484 = pneg %p483
      $region91: #{spectral_conv_s2_forward.1} parent=5 // pred_check_branch
        %486 = sbr.rel (%p484) target = $region93
      $region92: #{spectral_conv_s2_forward.1} parent=5 // pred_region
        %s487 = ssub.s32 %s8, 2
        // Predicated region
        $region94: #{spectral_conv_s2_forward.1} parent=92 // pred_check
          %p488 = pneg %p116
        $region95: #{spectral_conv_s2_forward.1} parent=92 // pred_check_branch
          %490 = sbr.rel (%p488) target = $region97
        $region96: #{spectral_conv_s2_forward.1} parent=92 // pred_region
          %s491 = sand.u32 %s101, 1
          %s492 = sand.u32 %s101, 1
          %s493 = smul.addr %s492, 32
          %s494 = scalar_lea.vmem [#allocation3], %s493
        $region97: #{spectral_conv_s2_forward.1} parent=92 // pred_fallthru
          _
      $region93: #{spectral_conv_s2_forward.1} parent=5 // pred_fallthru
        _
    $region6: #{spectral_conv_s2_forward.1} parent=1 // loop_footer
      %s12 = sadd.s32 1, %s8
    $region7: #{spectral_conv_s2_forward.1} parent=1 // loop_footer_branch
      %7 = sbr.rel target = $region3
    $region8: #{spectral_conv_s2_forward.1} parent=1 // loop_exit
      _

// kernel: reverse.0
$region0: #{reverse.0}
  %s0 = inlined_call_operand.vmem [shape: f32[2,4,16,7], index: 0, kind: input, shape index: {}]
  %s1 = inlined_call_operand.vmem [shape: f32[2,4,16,7], index: 1, kind: output, shape index: {}]
  $region1: #{reverse.0} parent=0
    #allocation0 [shape = 'u8[65536]{0}', space=vmem, size = 0x10000, scoped, tag = 'operand span for operand 0']
    #allocation1 [shape = 'u8[32768]{0}', space=vmem, size = 0x8000, scoped, tag = 'operand span for operand 1']
    %s2 = scalar_lea.vmem [#allocation0], 8
    // Predicated region
    $region2: #{reverse.0} parent=1 // pred_check
      _
    $region3: #{reverse.0} parent=1 // pred_check_branch
      %4 = sbr.rel (0) target = $region5
    $region4: #{reverse.0} parent=1 // pred_region
      // Predicated region
      $region6: #{reverse.0} parent=4 // pred_check
        _
      $region7: #{reverse.0} parent=4 // pred_check_branch
        %6 = sbr.rel (0) target = $region9
      $region8: #{reverse.0} parent=4 // pred_region
        // Predicated region
        $region21: #{reverse.0} parent=8 // pred_check
          _
        $region22: #{reverse.0} parent=8 // pred_check_branch
          %36 = sbr.rel (0) target = $region24
        $region23: #{reverse.0} parent=8 // pred_region
          loop: start=0, step=1, limit=1
          $region25: #{reverse.0} parent=23 // loop_pre_header
            _
          $region26: #{reverse.0} parent=23 // loop_header
            %s38 = sphi 0, %s42
            %p39 = scmp.ge.s32.totalorder %s38, 1
            %s43 = sphi %s0, %s0
            %s44 = sphi %s2, %s2
          $region27: #{reverse.0} parent=23 // loop_header_branch
            %41 = sbr.rel (%p39) target = $region31
          $region28: #{reverse.0} parent=23 // loop_body
            %v45 = vld [vmem:[%s43] sm:$0xff]
            %46 = vst [vmem:[%s44] sm:$0xff] %v45
            %v47 = vld [vmem:[%s43 + $0x8] sm:$0xff]
            %48 = vst [vmem:[%s44 + $0x10] sm:$0xff] %v47
            %v49 = vld [vmem:[%s43 + $0x10] sm:$0xff]
            %50 = vst [vmem:[%s44 + $0x20] sm:$0xff] %v49
            %v51 = vld [vmem:[%s43 + $0x18] sm:$0xff]
            %52 = vst [vmem:[%s44 + $0x30] sm:$0xff] %v51
            %v53 = vld [vmem:[%s43 + $0x20] sm:$0xff]
            %54 = vst [vmem:[%s44 + $0x40] sm:$0xff] %v53
            %v55 = vld [vmem:[%s43 + $0x28] sm:$0xff]
            %56 = vst [vmem:[%s44 + $0x50] sm:$0xff] %v55
            %v57 = vld [vmem:[%s43 + $0x30] sm:$0xff]
            %58 = vst [vmem:[%s44 + $0x60] sm:$0xff] %v57
            %v59 = vld [vmem:[%s43 + $0x38] sm:$0xff]
            %60 = vst [vmem:[%s44 + $0x70] sm:$0xff] %v59
          $region29: #{reverse.0} parent=23 // loop_footer
            %s42 = sadd.s32 1, %s38
          $region30: #{reverse.0} parent=23 // loop_footer_branch
            %37 = sbr.rel target = $region26
          $region31: #{reverse.0} parent=23 // loop_exit
            _
        $region24: #{reverse.0} parent=8 // pred_fallthru
          _
        // Predicated region
        $region32: #{reverse.0} parent=8 // pred_check
          _
        $region33: #{reverse.0} parent=8 // pred_check_branch
          %62 = sbr.rel target = $region35
        $region34: #{reverse.0} parent=8 // pred_region
          _
        $region35: #{reverse.0} parent=8 // pred_fallthru
          _
      $region9: #{reverse.0} parent=4 // pred_fallthru
        _
      // Predicated region
      $region10: #{reverse.0} parent=4 // pred_check
        _
      $region11: #{reverse.0} parent=4 // pred_check_branch
        %8 = sbr.rel target = $region13
      $region12: #{reverse.0} parent=4 // pred_region
        %s10 = ssub.s32 256, 1
        loop: start=0, step=1, limit=1
        $region14: #{reverse.0} parent=12 // loop_pre_header
          _
        $region15: #{reverse.0} parent=12 // loop_header
          %s12 = sphi 0, %s16
          %p13 = scmp.ge.s32.totalorder %s12, 1
          %s17 = sphi %s0, %s0
          %s18 = sphi %s2, %s2
        $region16: #{reverse.0} parent=12 // loop_header_branch
          %15 = sbr.rel (%p13) target = $region20
        $region17: #{reverse.0} parent=12 // loop_body
          %v19 = vld [vmem:[%s17] sm:%s10]
          %20 = vst [vmem:[%s18] sm:%s10] %v19
          %v21 = vld [vmem:[%s17 + $0x8] sm:%s10]
          %22 = vst [vmem:[%s18 + $0x10] sm:%s10] %v21
          %v23 = vld [vmem:[%s17 + $0x10] sm:%s10]
          %24 = vst [vmem:[%s18 + $0x20] sm:%s10] %v23
          %v25 = vld [vmem:[%s17 + $0x18] sm:%s10]
          %26 = vst [vmem:[%s18 + $0x30] sm:%s10] %v25
          %v27 = vld [vmem:[%s17 + $0x20] sm:%s10]
          %28 = vst [vmem:[%s18 + $0x40] sm:%s10] %v27
          %v29 = vld [vmem:[%s17 + $0x28] sm:%s10]
          %30 = vst [vmem:[%s18 + $0x50] sm:%s10] %v29
          %v31 = vld [vmem:[%s17 + $0x30] sm:%s10]
          %32 = vst [vmem:[%s18 + $0x60] sm:%s10] %v31
          %v33 = vld [vmem:[%s17 + $0x38] sm:%s10]
          %34 = vst [vmem:[%s18 + $0x70] sm:%s10] %v33
        $region18: #{reverse.0} parent=12 // loop_footer
          %s16 = sadd.s32 1, %s12
        $region19: #{reverse.0} parent=12 // loop_footer_branch
          %11 = sbr.rel target = $region15
        $region20: #{reverse.0} parent=12 // loop_exit
          _
      $region13: #{reverse.0} parent=4 // pred_fallthru
        _
    $region5: #{reverse.0} parent=1 // pred_fallthru
      _
    %63 = vnop
    %s64 = scalar_lea.vmem [#allocation0], 7
    %v65 = vld [vmem:[%s64] ss:$-1 sm:$0xff]
    %v66 = vrot.slane %v65, 1
    %67 = vst [vmem:[#allocation1] sm:$0xff] %v66
    %s68 = scalar_lea.vmem [#allocation0], 8
    %s69 = scalar_lea.vmem %s68, 7 [#allocation0]
    %v70 = vld [vmem:[%s69] ss:$-1 sm:$0xff]
    %v71 = vrot.slane %v70, 1
    %v72 = vlaneseq
    %v73 = vshrl.u32 %v72, 7
    %vm74 = vcmp.lt.s32.totalorder %v73, 7
    %75 = vst.msk [vmem:[#allocation1] sm:$0xff] %vm74, %v71
    %s76 = scalar_lea.vmem [#allocation1], 8
    %s77 = scalar_lea.vmem [#allocation0], 16
    %s78 = scalar_lea.vmem %s77, 7 [#allocation0]
    %v79 = vld [vmem:[%s78] ss:$-1 sm:$0xff]
    %v80 = vrot.slane %v79, 1
    %81 = vst [vmem:[%s76] sm:$0xff] %v80
    %s82 = scalar_lea.vmem %s77, 8 [#allocation0]
    %s83 = scalar_lea.vmem %s82, 7 [#allocation0]
    %v84 = vld [vmem:[%s83] ss:$-1 sm:$0xff]
    %v85 = vrot.slane %v84, 1
    %v86 = vlaneseq
    %v87 = vshrl.u32 %v86, 7
    %vm88 = vcmp.lt.s32.totalorder %v87, 7
    %89 = vst.msk [vmem:[%s76] sm:$0xff] %vm88, %v85
    %s90 = scalar_lea.vmem [#allocation1], 16
    %s91 = scalar_lea.vmem [#allocation0], 32
    %s92 = scalar_lea.vmem %s91, 7 [#allocation0]
    %v93 = vld [vmem:[%s92] ss:$-1 sm:$0xff]
    %v94 = vrot.slane %v93, 1
    %95 = vst [vmem:[%s90] sm:$0xff] %v94
    %s96 = scalar_lea.vmem %s91, 8 [#allocation0]
    %s97 = scalar_lea.vmem %s96, 7 [#allocation0]
    %v98 = vld [vmem:[%s97] ss:$-1 sm:$0xff]
    %v99 = vrot.slane %v98, 1
    %v100 = vlaneseq
    %v101 = vshrl.u32 %v100, 7
    %vm102 = vcmp.lt.s32.totalorder %v101, 7
    %103 = vst.msk [vmem:[%s90] sm:$0xff] %vm102, %v99
    %s104 = scalar_lea.vmem [#allocation1], 24
    %s105 = scalar_lea.vmem [#allocation0], 48
    %s106 = scalar_lea.vmem %s105, 7 [#allocation0]
    %v107 = vld [vmem:[%s106] ss:$-1 sm:$0xff]
    %v108 = vrot.slane %v107, 1
    %109 = vst [vmem:[%s104] sm:$0xff] %v108
    %s110 = scalar_lea.vmem %s105, 8 [#allocation0]
    %s111 = scalar_lea.vmem %s110, 7 [#allocation0]
    %v112 = vld [vmem:[%s111] ss:$-1 sm:$0xff]
    %v113 = vrot.slane %v112, 1
    %v114 = vlaneseq
    %v115 = vshrl.u32 %v114, 7
    %vm116 = vcmp.lt.s32.totalorder %v115, 7
    %117 = vst.msk [vmem:[%s104] sm:$0xff] %vm116, %v113
    %s118 = scalar_lea.vmem [#allocation1], 32
    %s119 = scalar_lea.vmem [#allocation0], 64
    %s120 = scalar_lea.vmem %s119, 7 [#allocation0]
    %v121 = vld [vmem:[%s120] ss:$-1 sm:$0xff]
    %v122 = vrot.slane %v121, 1
    %123 = vst [vmem:[%s118] sm:$0xff] %v122
    %s124 = scalar_lea.vmem %s119, 8 [#allocation0]
    %s125 = scalar_lea.vmem %s124, 7 [#allocation0]
    %v126 = vld [vmem:[%s125] ss:$-1 sm:$0xff]
    %v127 = vrot.slane %v126, 1
    %v128 = vlaneseq
    %v129 = vshrl.u32 %v128, 7
    %vm130 = vcmp.lt.s32.totalorder %v129, 7
    %131 = vst.msk [vmem:[%s118] sm:$0xff] %vm130, %v127
    %s132 = scalar_lea.vmem [#allocation1], 40
    %s133 = scalar_lea.vmem [#allocation0], 80
    %s134 = scalar_lea.vmem %s133, 7 [#allocation0]
    %v135 = vld [vmem:[%s134] ss:$-1 sm:$0xff]
    %v136 = vrot.slane %v135, 1
    %137 = vst [vmem:[%s132] sm:$0xff] %v136
    %s138 = scalar_lea.vmem %s133, 8 [#allocation0]
    %s139 = scalar_lea.vmem %s138, 7 [#allocation0]
    %v140 = vld [vmem:[%s139] ss:$-1 sm:$0xff]
    %v141 = vrot.slane %v140, 1
    %v142 = vlaneseq
    %v143 = vshrl.u32 %v142, 7
    %vm144 = vcmp.lt.s32.totalorder %v143, 7
    %145 = vst.msk [vmem:[%s132] sm:$0xff] %vm144, %v141
    %s146 = scalar_lea.vmem [#allocation1], 48
    %s147 = scalar_lea.vmem [#allocation0], 96
    %s148 = scalar_lea.vmem %s147, 7 [#allocation0]
    %v149 = vld [vmem:[%s148] ss:$-1 sm:$0xff]
    %v150 = vrot.slane %v149, 1
    %151 = vst [vmem:[%s146] sm:$0xff] %v150
    %s152 = scalar_lea.vmem %s147, 8 [#allocation0]
    %s153 = scalar_lea.vmem %s152, 7 [#allocation0]
    %v154 = vld [vmem:[%s153] ss:$-1 sm:$0xff]
    %v155 = vrot.slane %v154, 1
    %v156 = vlaneseq
    %v157 = vshrl.u32 %v156, 7
    %vm158 = vcmp.lt.s32.totalorder %v157, 7
    %159 = vst.msk [vmem:[%s146] sm:$0xff] %vm158, %v155
    %s160 = scalar_lea.vmem [#allocation1], 56
    %s161 = scalar_lea.vmem [#allocation0], 112
    %s162 = scalar_lea.vmem %s161, 7 [#allocation0]
    %v163 = vld [vmem:[%s162] ss:$-1 sm:$0xff]
    %v164 = vrot.slane %v163, 1
    %165 = vst [vmem:[%s160] sm:$0xff] %v164
    %s166 = scalar_lea.vmem %s161, 8 [#allocation0]
    %s167 = scalar_lea.vmem %s166, 7 [#allocation0]
    %v168 = vld [vmem:[%s167] ss:$-1 sm:$0xff]
    %v169 = vrot.slane %v168, 1
    %v170 = vlaneseq
    %v171 = vshrl.u32 %v170, 7
    %vm172 = vcmp.lt.s32.totalorder %v171, 7
    %173 = vst.msk [vmem:[%s160] sm:$0xff] %vm172, %v169
    // Predicated region
    $region36: #{reverse.0} parent=1 // pred_check
      _
    $region37: #{reverse.0} parent=1 // pred_check_branch
      %175 = sbr.rel (0) target = $region39
    $region38: #{reverse.0} parent=1 // pred_region
      // Predicated region
      $region40: #{reverse.0} parent=38 // pred_check
        _
      $region41: #{reverse.0} parent=38 // pred_check_branch
        %177 = sbr.rel (0) target = $region43
      $region42: #{reverse.0} parent=38 // pred_region
        // Predicated region
        $region55: #{reverse.0} parent=42 // pred_check
          _
        $region56: #{reverse.0} parent=42 // pred_check_branch
          %207 = sbr.rel (0) target = $region58
        $region57: #{reverse.0} parent=42 // pred_region
          loop: start=0, step=1, limit=1
          $region59: #{reverse.0} parent=57 // loop_pre_header
            _
          $region60: #{reverse.0} parent=57 // loop_header
            %s209 = sphi 0, %s213
            %p210 = scmp.ge.s32.totalorder %s209, 1
            %s214 = sphi [#allocation1], [#allocation1]
            %s215 = sphi %s1, %s1
          $region61: #{reverse.0} parent=57 // loop_header_branch
            %212 = sbr.rel (%p210) target = $region65
          $region62: #{reverse.0} parent=57 // loop_body
            %v216 = vld [vmem:[%s214] sm:$0xff]
            %217 = vst [vmem:[%s215] sm:$0xff] %v216
            %v218 = vld [vmem:[%s214 + $0x8] sm:$0xff]
            %219 = vst [vmem:[%s215 + $0x8] sm:$0xff] %v218
            %v220 = vld [vmem:[%s214 + $0x10] sm:$0xff]
            %221 = vst [vmem:[%s215 + $0x10] sm:$0xff] %v220
            %v222 = vld [vmem:[%s214 + $0x18] sm:$0xff]
            %223 = vst [vmem:[%s215 + $0x18] sm:$0xff] %v222
            %v224 = vld [vmem:[%s214 + $0x20] sm:$0xff]
            %225 = vst [vmem:[%s215 + $0x20] sm:$0xff] %v224
            %v226 = vld [vmem:[%s214 + $0x28] sm:$0xff]
            %227 = vst [vmem:[%s215 + $0x28] sm:$0xff] %v226
            %v228 = vld [vmem:[%s214 + $0x30] sm:$0xff]
            %229 = vst [vmem:[%s215 + $0x30] sm:$0xff] %v228
            %v230 = vld [vmem:[%s214 + $0x38] sm:$0xff]
            %231 = vst [vmem:[%s215 + $0x38] sm:$0xff] %v230
          $region63: #{reverse.0} parent=57 // loop_footer
            %s213 = sadd.s32 1, %s209
          $region64: #{reverse.0} parent=57 // loop_footer_branch
            %208 = sbr.rel target = $region60
          $region65: #{reverse.0} parent=57 // loop_exit
            _
        $region58: #{reverse.0} parent=42 // pred_fallthru
          _
        // Predicated region
        $region66: #{reverse.0} parent=42 // pred_check
          _
        $region67: #{reverse.0} parent=42 // pred_check_branch
          %233 = sbr.rel target = $region69
        $region68: #{reverse.0} parent=42 // pred_region
          _
        $region69: #{reverse.0} parent=42 // pred_fallthru
          _
      $region43: #{reverse.0} parent=38 // pred_fallthru
        _
      // Predicated region
      $region44: #{reverse.0} parent=38 // pred_check
        _
      $region45: #{reverse.0} parent=38 // pred_check_branch
        %179 = sbr.rel target = $region47
      $region46: #{reverse.0} parent=38 // pred_region
        %s181 = ssub.s32 256, 1
        loop: start=0, step=1, limit=1
        $region48: #{reverse.0} parent=46 // loop_pre_header
          _
        $region49: #{reverse.0} parent=46 // loop_header
          %s183 = sphi 0, %s187
          %p184 = scmp.ge.s32.totalorder %s183, 1
          %s188 = sphi [#allocation1], [#allocation1]
          %s189 = sphi %s1, %s1
        $region50: #{reverse.0} parent=46 // loop_header_branch
          %186 = sbr.rel (%p184) target = $region54
        $region51: #{reverse.0} parent=46 // loop_body
          %v190 = vld [vmem:[%s188] sm:%s181]
          %191 = vst [vmem:[%s189] sm:%s181] %v190
          %v192 = vld [vmem:[%s188 + $0x8] sm:%s181]
          %193 = vst [vmem:[%s189 + $0x8] sm:%s181] %v192
          %v194 = vld [vmem:[%s188 + $0x10] sm:%s181]
          %195 = vst [vmem:[%s189 + $0x10] sm:%s181] %v194
          %v196 = vld [vmem:[%s188 + $0x18] sm:%s181]
          %197 = vst [vmem:[%s189 + $0x18] sm:%s181] %v196
          %v198 = vld [vmem:[%s188 + $0x20] sm:%s181]
          %199 = vst [vmem:[%s189 + $0x20] sm:%s181] %v198
          %v200 = vld [vmem:[%s188 + $0x28] sm:%s181]
          %201 = vst [vmem:[%s189 + $0x28] sm:%s181] %v200
          %v202 = vld [vmem:[%s188 + $0x30] sm:%s181]
          %203 = vst [vmem:[%s189 + $0x30] sm:%s181] %v202
          %v204 = vld [vmem:[%s188 + $0x38] sm:%s181]
          %205 = vst [vmem:[%s189 + $0x38] sm:%s181] %v204
        $region52: #{reverse.0} parent=46 // loop_footer
          %s187 = sadd.s32 1, %s183
        $region53: #{reverse.0} parent=46 // loop_footer_branch
          %182 = sbr.rel target = $region49
        $region54: #{reverse.0} parent=46 // loop_exit
          _
      $region47: #{reverse.0} parent=38 // pred_fallthru
        _
    $region39: #{reverse.0} parent=1 // pred_fallthru
      _
    %234 = vnop

</llo_original>
